<compile_context>
chip_gen: v7x
topology: tpu7x:2x2x1
jax: 0.10.0
libtpu: 0.0.40
codegen_flags: <defaults>
</compile_context>

<pallas_src>
import functools

import jax
import jax.numpy as jnp
from jax import lax
from jax.experimental import pallas as pl
from jax.experimental.pallas import tpu as pltpu


def _to_basis_kernel(evecs_ref, featm_ref, coefs_ref, spec_ref, acc_ref, *,
                     v_total, tv, nv_local, needs_mask):
    """Accumulate evecs^T @ (feat*mass) over V tiles; scale by exp(-lambda*t)."""
    s = pl.program_id(0)   # V-reduction split (extent 1 or 2)
    v = pl.program_id(2)   # V tile within this split (reduction axis, last)

    @pl.when(v == 0)
    def _init():
        acc_ref[...] = jnp.zeros_like(acc_ref)

    e = evecs_ref[...]     # [tv, K] compute dtype
    f = featm_ref[...]     # [tv, C] compute dtype
    if needs_mask:
        # Ragged last tile: OOB rows are undefined (could be NaN/Inf), so mask
        # BOTH operands to zero (NaN * 0 would still poison the accumulator).
        row0 = (s * nv_local + v) * tv
        rows = lax.broadcasted_iota(jnp.int32, (tv, 1), 0) + row0
        valid = rows < v_total                       # [tv, 1]
        e = jnp.where(valid, e, 0)
        f = jnp.where(valid, f, 0)

    # [tv, K]^T @ [tv, C] -> [K, C], f32 accumulation on the MXU.
    acc_ref[...] += lax.dot_general(
        e, f, dimension_numbers=(((0,), (0,)), ((), ())),
        preferred_element_type=jnp.float32)

    @pl.when(v == nv_local - 1)
    def _finalize():
        # coefs multiply in f32, single cast to the (compute-dtype) spec store.
        spec_ref[...] = (acc_ref[...] * coefs_ref[...]).astype(spec_ref.dtype)


def _from_basis_kernel(evecs_ref, spec_ref, out_ref, *, n_split):
    """out[V_tile, C] = evecs[V_tile, K] @ spec[K, C] (sum of split partials)."""
    spec = spec_ref[0]
    for i in range(1, n_split):
        spec = spec + spec_ref[i]
    out = jnp.dot(evecs_ref[...], spec, preferred_element_type=jnp.float32)
    out_ref[...] = out.astype(out_ref.dtype)


def _vmem_limit(stream_block_bytes, resident_bytes):
    # Double-buffered streamed blocks + resident blocks + headroom, capped
    # comfortably under v7x's 64 MiB physical VMEM (v5e/v6e have 128 MiB).
    est = 2 * stream_block_bytes + resident_bytes
    return int(min(48 * 1024 * 1024, max(16 * 1024 * 1024, 2 * est)))


def learned_time_diffusion(feat, mass, evals, evecs, diffusion_time, *,
                           compute_dtype=jnp.bfloat16, v_tile=1024,
                           out_dtype=None):
    """Spectral LearnedTimeDiffusion forward.

    feat : [B, V, C]   mass : [B, V]   evals : [B, K]   evecs : [B, V, K]
    diffusion_time : [C]   ->   [B, V, C] (out_dtype, default feat.dtype)
    """
    B, V, C = feat.shape
    K = evals.shape[-1]
    assert evecs.shape == (B, V, K)
    assert mass.shape == (B, V)
    out_dtype = feat.dtype if out_dtype is None else out_dtype

    # torch.clamp(self.diffusion_time, min=1e-08); exp stays in f32.
    t = jnp.maximum(diffusion_time.astype(jnp.float32), 1e-8)                 # [C]
    coefs = jnp.exp(-evals.astype(jnp.float32)[..., None] * t[None, None, :])  # [B,K,C]

    # Single compute-dtype evecs copy shared by both kernels; mass folded into
    # the feat cast (f32 multiply, then one rounding).  If vertex areas span
    # many orders of magnitude, move the mass multiply into kernel 1 in f32.
    evecs_c = evecs.astype(compute_dtype)
    featm_c = (feat.astype(jnp.float32)
               * mass.astype(jnp.float32)[..., None]).astype(compute_dtype)

    # V tiling: multiples of 128 (lane/sublane + DMA friendly).  No padding --
    # the ragged last tile is masked in kernel 1 and its OOB output rows are
    # dropped by Pallas in kernel 2.
    tv = max(128, (int(v_tile) // 128) * 128)
    if tv >= V:
        tv = V                                   # single full-extent tile
    n_v = -(-V // tv)
    needs_mask = (V % tv) != 0

    # v7x has 2 TensorCores: when B is odd (esp. B == 1) split the V reduction
    # of kernel 1 into two parallel halves so both cores get to_basis work.
    n_split = 2 if (B % 2 == 1 and n_v >= 2 and n_v % 2 == 0) else 1
    nv_local = n_v // n_split

    cd_bytes = jnp.dtype(compute_dtype).itemsize
    out_bytes = jnp.dtype(out_dtype).itemsize

    # ---- kernel 1: to_basis + spectral scaling -> spec [n_split, B, K, C] ----
    k1_stream = (tv * K + tv * C) * cd_bytes
    k1_resident = K * C * (4 + 4 + cd_bytes)     # coefs(f32) + acc(f32) + spec
    spec = pl.pallas_call(
        functools.partial(_to_basis_kernel, v_total=V, tv=tv,
                          nv_local=nv_local, needs_mask=needs_mask),
        out_shape=jax.ShapeDtypeStruct((n_split, B, K, C), compute_dtype),
        grid_spec=pltpu.PrefetchScalarGridSpec(
            num_scalar_prefetch=0,
            grid=(n_split, B, nv_local),          # reduction axis last
            in_specs=[
                pl.BlockSpec((None, tv, K),
                             lambda s, b, v: (b, s * nv_local + v, 0)),   # evecs
                pl.BlockSpec((None, tv, C),
                             lambda s, b, v: (b, s * nv_local + v, 0)),   # feat*mass
                pl.BlockSpec((None, K, C), lambda s, b, v: (b, 0, 0)),    # coefs
            ],
            out_specs=pl.BlockSpec((None, None, K, C),
                                   lambda s, b, v: (s, b, 0, 0)),
            scratch_shapes=[pltpu.VMEM((K, C), jnp.float32)],
        ),
        compiler_params=pltpu.CompilerParams(
            dimension_semantics=("parallel", "parallel", "arbitrary"),
            vmem_limit_bytes=_vmem_limit(k1_stream, k1_resident)),
    )(evecs_c, featm_c, coefs)

    # ---- kernel 2: from_basis -> out [B, V, C] ----
    k2_stream = tv * K * cd_bytes + tv * C * out_bytes
    k2_resident = n_split * K * C * cd_bytes
    out = pl.pallas_call(
        functools.partial(_from_basis_kernel, n_split=n_split),
        out_shape=jax.ShapeDtypeStruct((B, V, C), out_dtype),
        grid_spec=pltpu.PrefetchScalarGridSpec(
            num_scalar_prefetch=0,
            grid=(B, n_v),
            in_specs=[
                pl.BlockSpec((None, tv, K), lambda b, v: (b, v, 0)),          # evecs
                pl.BlockSpec((n_split, None, K, C), lambda b, v: (0, b, 0, 0)),  # spec
            ],
            out_specs=pl.BlockSpec((None, tv, C), lambda b, v: (b, v, 0)),
        ),
        compiler_params=pltpu.CompilerParams(
            dimension_semantics=("parallel", "parallel"),
            vmem_limit_bytes=_vmem_limit(k2_stream, k2_resident)),
    )(evecs_c, spec)

    return out


def _reference(feat, mass, evals, evecs, diffusion_time):
    t = jnp.maximum(diffusion_time, 1e-8)
    hp = jax.lax.Precision.HIGHEST
    feat_spec = jnp.einsum("bvk,bvc->bkc", evecs, feat * mass[..., None],
                           precision=hp)
    coefs = jnp.exp(-evals[..., None] * t[None, None, :])
    return jnp.einsum("bvk,bkc->bvc", evecs, coefs * feat_spec, precision=hp)


if __name__ == "__main__":
    # DiffusionNet defaults: hidden_channels = 128, k_eig = 128 (lane-dense).
    # V is deliberately NOT a multiple of the tile so ragged-tile masking and
    # OOB-output dropping are exercised.
    B, V, K, C = 2, 500, 128, 128

    key = jax.random.PRNGKey(0)
    k_feat, k_mass, k_evals, k_evecs, k_t = jax.random.split(key, 5)

    feat = jax.random.normal(k_feat, (B, V, C), dtype=jnp.float32)
    mass = jax.random.uniform(k_mass, (B, V), dtype=jnp.float32,
                              minval=0.5, maxval=1.5)
    evals = jnp.sort(jnp.abs(jax.random.normal(k_evals, (B, K),
                                               dtype=jnp.float32)), axis=-1)
    evecs = jax.random.normal(k_evecs, (B, V, K), dtype=jnp.float32) / jnp.sqrt(V)
    # nn.Parameter of shape [C]; the module clamps it to >= 1e-8.
    diffusion_time = jnp.abs(jax.random.normal(k_t, (C,), dtype=jnp.float32)) * 0.1

    ref = _reference(feat, mass, evals, evecs, diffusion_time)

    # Production path: bf16 operands / f32 accumulation, single full-extent V tile.
    out = jax.block_until_ready(
        learned_time_diffusion(feat, mass, evals, evecs, diffusion_time))
    assert out.shape == (B, V, C) and out.dtype == feat.dtype
    assert jnp.allclose(out, ref, atol=3e-2, rtol=3e-2), "bf16 path mismatch"

    # f32 path with small tiles: multi-tile V reduction + ragged-tile masking.
    out32 = jax.block_until_ready(
        learned_time_diffusion(feat, mass, evals, evecs, diffusion_time,
                               compute_dtype=jnp.float32, v_tile=128))
    assert jnp.allclose(out32, ref, atol=1e-2, rtol=1e-2), "f32 path mismatch"

    # B == 1: exercises the 2-way V-reduction split (kernel-1 parallel axis).
    out1 = jax.block_until_ready(
        learned_time_diffusion(feat[:1], mass[:1], evals[:1], evecs[:1],
                               diffusion_time, compute_dtype=jnp.float32,
                               v_tile=128))
    assert jnp.allclose(out1, ref[:1], atol=1e-2, rtol=1e-2), "split path mismatch"

    # Optional bf16 output stream (downstream MiniMLP accepts bf16).
    out_bf16 = jax.block_until_ready(
        learned_time_diffusion(feat, mass, evals, evecs, diffusion_time,
                               out_dtype=jnp.bfloat16))
    assert out_bf16.dtype == jnp.bfloat16
    assert jnp.allclose(out_bf16.astype(jnp.float32), ref, atol=5e-2, rtol=5e-2)

    print("KERNEL_OK")
</pallas_src>

<mosaic_0001>
module attributes {stable_mosaic.version = 11 : i64} {
  func.func @_to_basis_kernel(%arg0: i32, %arg1: i32, %arg2: i32, %arg3: memref<1x500x128xbf16, #tpu.memory_space<vmem>>, %arg4: memref<1x500x128xbf16, #tpu.memory_space<vmem>>, %arg5: memref<1x128x128xf32, #tpu.memory_space<vmem>>, %arg6: memref<1x1x128x128xbf16, #tpu.memory_space<vmem>>, %arg7: memref<128x128xf32, #tpu.memory_space<vmem>>) attributes {dimension_semantics = [#tpu.dimension_semantics<parallel>, #tpu.dimension_semantics<parallel>, #tpu.dimension_semantics<arbitrary>], iteration_bounds = array<i64: 1, 2, 1>, scalar_prefetch = 0 : i64, scratch_operands = 1 : i64, tpu.core_type = #tpu.core_type<tc>, window_params = [{transform_indices = @transform_0, window_bounds = array<i64: 1, 500, 128>}, {transform_indices = @transform_1, window_bounds = array<i64: 1, 500, 128>}, {transform_indices = @transform_2, window_bounds = array<i64: 1, 128, 128>}, {transform_indices = @transform_3, window_bounds = array<i64: 1, 1, 128, 128>}]} {
    %c0_i32 = arith.constant 0 : i32
    %0 = arith.cmpi eq, %arg2, %c0_i32 : i32
    %1 = arith.extui %0 : i1 to i32
    %c0_i32_0 = arith.constant 0 : i32
    %2 = arith.cmpi ne, %1, %c0_i32_0 : i32
    scf.if %2 {
      %cst_12 = arith.constant 0.000000e+00 : f32
      %14 = vector.broadcast %cst_12 : f32 to vector<128x128xf32>
      %c0_13 = arith.constant 0 : index
      %c0_14 = arith.constant 0 : index
      %15 = vector.load %arg7[%c0_13, %c0_14] : memref<128x128xf32, #tpu.memory_space<vmem>>, vector<128x128xf32>
      tpu.vector_store %arg7[%c0_13, %c0_14], %14 {strides = array<i32>} : memref<128x128xf32, #tpu.memory_space<vmem>>, vector<128x128xf32>,
    } else {
    }
    %c0 = arith.constant 0 : index
    %c0_1 = arith.constant 0 : index
    %c0_2 = arith.constant 0 : index
    %3 = vector.load %arg3[%c0, %c0_1, %c0_2] : memref<1x500x128xbf16, #tpu.memory_space<vmem>>, vector<1x500x128xbf16>
    %4 = vector.shape_cast %3 : vector<1x500x128xbf16> to vector<500x128xbf16>
    %c0_3 = arith.constant 0 : index
    %c0_4 = arith.constant 0 : index
    %c0_5 = arith.constant 0 : index
    %5 = vector.load %arg4[%c0_3, %c0_4, %c0_5] : memref<1x500x128xbf16, #tpu.memory_space<vmem>>, vector<1x500x128xbf16>
    %6 = vector.shape_cast %5 : vector<1x500x128xbf16> to vector<500x128xbf16>
    %c0_6 = arith.constant 0 : index
    %c0_7 = arith.constant 0 : index
    %7 = vector.load %arg7[%c0_6, %c0_7] : memref<128x128xf32, #tpu.memory_space<vmem>>, vector<128x128xf32>
    %cst = arith.constant dense<0.000000e+00> : vector<128x128xf32>
    %8 = tpu.matmul %4, %6, %cst {dimension_numbers = #tpu.dot_dimension_numbers<[0], [0], [1], [1], [0, 1, 1, 1], [], []>} : vector<500x128xbf16>, vector<500x128xbf16>, vector<128x128xf32> -> vector<128x128xf32>
    %9 = arith.addf %7, %8 : vector<128x128xf32>
    %c0_8 = arith.constant 0 : index
    %c0_9 = arith.constant 0 : index
    %10 = vector.load %arg7[%c0_8, %c0_9] : memref<128x128xf32, #tpu.memory_space<vmem>>, vector<128x128xf32>
    tpu.vector_store %arg7[%c0_8, %c0_9], %9 {strides = array<i32>} : memref<128x128xf32, #tpu.memory_space<vmem>>, vector<128x128xf32>,
    %c0_i32_10 = arith.constant 0 : i32
    %11 = arith.cmpi eq, %arg2, %c0_i32_10 : i32
    %12 = arith.extui %11 : i1 to i32
    %c0_i32_11 = arith.constant 0 : i32
    %13 = arith.cmpi ne, %12, %c0_i32_11 : i32
    scf.if %13 {
      %c0_12 = arith.constant 0 : index
      %c0_13 = arith.constant 0 : index
      %14 = vector.load %arg7[%c0_12, %c0_13] : memref<128x128xf32, #tpu.memory_space<vmem>>, vector<128x128xf32>
      %c0_14 = arith.constant 0 : index
      %c0_15 = arith.constant 0 : index
      %c0_16 = arith.constant 0 : index
      %15 = vector.load %arg5[%c0_14, %c0_15, %c0_16] : memref<1x128x128xf32, #tpu.memory_space<vmem>>, vector<1x128x128xf32>
      %16 = vector.shape_cast %15 : vector<1x128x128xf32> to vector<128x128xf32>
      %17 = arith.mulf %14, %16 : vector<128x128xf32>
      %18 = arith.truncf %17 : vector<128x128xf32> to vector<128x128xbf16>
      %c0_17 = arith.constant 0 : index
      %c0_18 = arith.constant 0 : index
      %c0_19 = arith.constant 0 : index
      %c0_20 = arith.constant 0 : index
      %19 = vector.load %arg6[%c0_17, %c0_18, %c0_19, %c0_20] : memref<1x1x128x128xbf16, #tpu.memory_space<vmem>>, vector<1x1x128x128xbf16>
      %20 = vector.shape_cast %19 : vector<1x1x128x128xbf16> to vector<128x128xbf16>
      %21 = vector.shape_cast %18 : vector<128x128xbf16> to vector<1x1x128x128xbf16>
      tpu.vector_store %arg6[%c0_17, %c0_18, %c0_19, %c0_20], %21 {strides = array<i32>} : memref<1x1x128x128xbf16, #tpu.memory_space<vmem>>, vector<1x1x128x128xbf16>,
    } else {
    }
    return
  }
  func.func @transform_0(%arg0: i32, %arg1: i32, %arg2: i32) -> (i32, i32, i32) {
    %c1_i32 = arith.constant 1 : i32
    %0 = arith.muli %arg0, %c1_i32 : i32
    %1 = arith.addi %0, %arg2 : i32
    %c0_i32 = arith.constant 0 : i32
    %c0_i32_0 = arith.constant 0 : i32
    return %arg1, %1, %c0_i32 : i32, i32, i32
  }
  func.func @transform_1(%arg0: i32, %arg1: i32, %arg2: i32) -> (i32, i32, i32) {
    %c1_i32 = arith.constant 1 : i32
    %0 = arith.muli %arg0, %c1_i32 : i32
    %1 = arith.addi %0, %arg2 : i32
    %c0_i32 = arith.constant 0 : i32
    %c0_i32_0 = arith.constant 0 : i32
    return %arg1, %1, %c0_i32 : i32, i32, i32
  }
  func.func @transform_2(%arg0: i32, %arg1: i32, %arg2: i32) -> (i32, i32, i32) {
    %c0_i32 = arith.constant 0 : i32
    %c0_i32_0 = arith.constant 0 : i32
    %c0_i32_1 = arith.constant 0 : i32
    return %arg1, %c0_i32, %c0_i32_0 : i32, i32, i32
  }
  func.func @transform_3(%arg0: i32, %arg1: i32, %arg2: i32) -> (i32, i32, i32, i32) {
    %c0_i32 = arith.constant 0 : i32
    %c0_i32_0 = arith.constant 0 : i32
    %c0_i32_1 = arith.constant 0 : i32
    return %arg0, %arg1, %c0_i32, %c0_i32_0 : i32, i32, i32, i32
  }
}

</mosaic_0001>

<llo_original>
// kernel: tpu_custom_call.1
$region0: #{tpu_custom_call.1}
  #allocation0 [shape = 'u32[]', space=smem, size = 0x4, offset = 0x4, fixed_abs, tag = 'smem constant byte address 0x4 - core index']
  #allocation1 [shape = 'u32[144,128]{1,0:T(1,128)}', space=vmem, size = 0x12000, scoped, tag = 'internal scratch']
  #allocation2 [shape = 'f32[128,128]{1,0:T(8,128)}', space=vmem, size = 0x10000, scoped, tag = 'scratch operand']
  %s0 = inlined_call_operand.vmem [shape: bf16[2,500,128], index: 0, kind: input, shape index: {}]
  %s1 = inlined_call_operand.vmem [shape: bf16[2,500,128], index: 1, kind: input, shape index: {}]
  %s2 = inlined_call_operand.vmem [shape: f32[2,128,128], index: 2, kind: input, shape index: {}]
  %s3 = inlined_call_operand.hbm [shape: bf16[1,2,128,128], index: 3, kind: output, shape index: {}]
  %s4 = sld [smem:[#allocation0]]
  $region53: #{tpu_custom_call.1} parent=0
    _
  %s6 = ssub.s32 1, %s4
  %s7 = scalar_select 0, %s6, %s4
  $region1: #{tpu_custom_call.1} parent=0
    #allocation3 [shape = 'u8[65536]{0}', space=vmem, size = 0x10000, scoped, tag = 'output window, operand 0']
    #allocation4 [shape = 's32[2]{0}', space=sflag, size = 0x8, scoped, tag = 'scoped memory for tpu_custom_call.1']
    %8 = vsyncpa [#allocation4], 0
    %s9 = scalar_lea.sflag [#allocation4], 1
    %10 = vsyncpa %s9, 0
    loop: start=0, step=1, limit=4
    $region2: #{tpu_custom_call.1} parent=1 // loop_pre_header
      _
    $region3: #{tpu_custom_call.1} parent=1 // loop_header
      %s12 = sphi 0, %s16
      %p13 = scmp.ge.s32.totalorder %s12, 4
      %s19 = sphi 0, %s38
      %s20 = sphi 0, %s34
      %s21 = sphi 0, %s30
      %s22 = sphi 0, %s19
      %s23 = sphi 0, %s20
      %s24 = sphi 0, %s21
      %s25 = sphi 0, %s22
      %s26 = sphi 0, %s23
      %s27 = sphi 0, %s24
      %s45 = sphi 0, %s47
      %s48 = sphi 0, %s45
      %s49 = sphi 0, %s48
      %s65 = sphi 0, %s49
      %s75 = sphi 0, %s77
      %s78 = sphi 0, %s75
      %s79 = sphi 0, %s78
      %s95 = sphi 0, %s79
      %s101 = sphi 0, %s103
      %s104 = sphi 0, %s101
      %s105 = sphi 0, %s104
      %s121 = sphi 0, %s105
      %s129 = sphi 0, %s131
      %s132 = sphi 0, %s129
      %s133 = sphi 0, %s132
      %s149 = sphi 0, %s133
    $region4: #{tpu_custom_call.1} parent=1 // loop_header_branch
      %15 = sbr.rel (%p13) target = $region8
    $region5: #{tpu_custom_call.1} parent=1 // loop_body
      %s17 = ssub.s32 %s12, 1
      %s18 = ssub.s32 %s12, 2
      %s28 = sadd.s32 1, %s21
      %p29 = scmp.ge.s32.totalorder %s28, 1
      %s30 = scalar_select %p29, 0, %s28
      %s31 = sadd.s32 1, %s20
      %s32 = scalar_select %p29, %s31, %s20
      %p33 = scmp.ge.s32.totalorder %s32, 2
      %s34 = scalar_select %p33, 0, %s32
      %s35 = sadd.s32 1, %s19
      %s36 = scalar_select %p33, %s35, %s19
      %p37 = scmp.ge.s32.totalorder %s36, 1
      %s38 = scalar_select %p37, 0, %s36
      %s39 = sadd.s32 %s19, %s21
      %s40 = sadd.s32 %s38, %s30
      %s41 = ssub.s32 %s20, %s34
      %s42 = ssub.s32 %s39, %s40
      %s43 = sor.u32 %s41, %s42
      %p44 = scmp.eq.s32.totalorder %s43, 0
      %s46 = sadd.s32 %s45, 1
      %s47 = scalar_select %p44, %s45, %s46
      %p50 = pneg %p44
      %p51 = scmp.eq.s32.totalorder %s12, 1
      %p52 = por %p50, %p51
      %p53 = scmp.ne.s32.totalorder %s45, %s48
      %p54 = scmp.eq.s32.totalorder %s12, 0
      %p55 = por %p53, %p54
      %p56 = scmp.ne.s32.totalorder %s45, %s48
      %p57 = scmp.eq.s32.totalorder %s17, 1
      %p58 = por %p56, %p57
      %p59 = scmp.ne.s32.totalorder %s48, %s49
      %p60 = scmp.eq.s32.totalorder %s17, 0
      %p61 = por %p59, %p60
      %p62 = scmp.ne.s32.totalorder %s48, %s49
      %p63 = scmp.eq.s32.totalorder %s18, 1
      %p64 = por %p62, %p63
      %p66 = scmp.ne.s32.totalorder %s49, %s65
      %p67 = scmp.eq.s32.totalorder %s18, 0
      %p68 = por %p66, %p67
      %s69 = sadd.s32 %s19, %s21
      %s70 = sadd.s32 %s38, %s30
      %s71 = ssub.s32 %s20, %s34
      %s72 = ssub.s32 %s69, %s70
      %s73 = sor.u32 %s71, %s72
      %p74 = scmp.eq.s32.totalorder %s73, 0
      %s76 = sadd.s32 %s75, 1
      %s77 = scalar_select %p74, %s75, %s76
      %p80 = pneg %p74
      %p81 = scmp.eq.s32.totalorder %s12, 1
      %p82 = por %p80, %p81
      %p83 = scmp.ne.s32.totalorder %s75, %s78
      %p84 = scmp.eq.s32.totalorder %s12, 0
      %p85 = por %p83, %p84
      %p86 = scmp.ne.s32.totalorder %s75, %s78
      %p87 = scmp.eq.s32.totalorder %s17, 1
      %p88 = por %p86, %p87
      %p89 = scmp.ne.s32.totalorder %s78, %s79
      %p90 = scmp.eq.s32.totalorder %s17, 0
      %p91 = por %p89, %p90
      %p92 = scmp.ne.s32.totalorder %s78, %s79
      %p93 = scmp.eq.s32.totalorder %s18, 1
      %p94 = por %p92, %p93
      %p96 = scmp.ne.s32.totalorder %s79, %s95
      %p97 = scmp.eq.s32.totalorder %s18, 0
      %p98 = por %p96, %p97
      %s99 = ssub.s32 %s20, %s34
      %p100 = scmp.eq.s32.totalorder %s99, 0
      %s102 = sadd.s32 %s101, 1
      %s103 = scalar_select %p100, %s101, %s102
      %p106 = pneg %p100
      %p107 = scmp.eq.s32.totalorder %s12, 1
      %p108 = por %p106, %p107
      %p109 = scmp.ne.s32.totalorder %s101, %s104
      %p110 = scmp.eq.s32.totalorder %s12, 0
      %p111 = por %p109, %p110
      %p112 = scmp.ne.s32.totalorder %s101, %s104
      %p113 = scmp.eq.s32.totalorder %s17, 1
      %p114 = por %p112, %p113
      %p115 = scmp.ne.s32.totalorder %s104, %s105
      %p116 = scmp.eq.s32.totalorder %s17, 0
      %p117 = por %p115, %p116
      %p118 = scmp.ne.s32.totalorder %s104, %s105
      %p119 = scmp.eq.s32.totalorder %s18, 1
      %p120 = por %p118, %p119
      %p122 = scmp.ne.s32.totalorder %s105, %s121
      %p123 = scmp.eq.s32.totalorder %s18, 0
      %p124 = por %p122, %p123
      %s125 = ssub.s32 %s19, %s38
      %s126 = ssub.s32 %s20, %s34
      %s127 = sor.u32 %s125, %s126
      %p128 = scmp.eq.s32.totalorder %s127, 0
      %s130 = sadd.s32 %s129, 1
      %s131 = scalar_select %p128, %s129, %s130
      %p134 = pneg %p128
      %p135 = scmp.eq.s32.totalorder %s12, 1
      %p136 = por %p134, %p135
      %p137 = scmp.ne.s32.totalorder %s129, %s132
      %p138 = scmp.eq.s32.totalorder %s12, 0
      %p139 = por %p137, %p138
      %p140 = scmp.ne.s32.totalorder %s129, %s132
      %p141 = scmp.eq.s32.totalorder %s17, 1
      %p142 = por %p140, %p141
      %p143 = scmp.ne.s32.totalorder %s132, %s133
      %p144 = scmp.eq.s32.totalorder %s17, 0
      %p145 = por %p143, %p144
      %p146 = scmp.ne.s32.totalorder %s132, %s133
      %p147 = scmp.eq.s32.totalorder %s18, 1
      %p148 = por %p146, %p147
      %p150 = scmp.ne.s32.totalorder %s133, %s149
      %p151 = scmp.eq.s32.totalorder %s18, 0
      %p152 = por %p150, %p151
      %p153 = scmp.le.s32.totalorder 1, %s12
      %p154 = scmp.lt.s32.totalorder %s12, 3
      %p155 = pnand %p153, %p154
      %p156 = pneg %p155
      // Predicated region
      $region9: #{tpu_custom_call.1} parent=5 // pred_check
        _
      $region10: #{tpu_custom_call.1} parent=5 // pred_check_branch
        %158 = sbr.rel (%p155) target = $region12
      $region11: #{tpu_custom_call.1} parent=5 // pred_region
        %s159 = ssub.s32 %s12, 1
      $region12: #{tpu_custom_call.1} parent=5 // pred_fallthru
        _
      %p160 = scmp.lt.s32.totalorder %s12, 2
      // Predicated region
      $region13: #{tpu_custom_call.1} parent=5 // pred_check
        %p161 = pneg %p160
      $region14: #{tpu_custom_call.1} parent=5 // pred_check_branch
        %163 = sbr.rel (%p161) target = $region16
      $region15: #{tpu_custom_call.1} parent=5 // pred_region
        // Predicated region
        $region17: #{tpu_custom_call.1} parent=15 // pred_check
          %p164 = pneg %p55
        $region18: #{tpu_custom_call.1} parent=15 // pred_check_branch
          %166 = sbr.rel (%p164) target = $region20
        $region19: #{tpu_custom_call.1} parent=15 // pred_region
          %s167 = sadd.s32 %s19, %s21
          %s168 = smul.u32 63, %s167
          %p169 = scmp.lt.s32.totalorder %s20, 1
          %s170 = scalar_select %p169, %s20, 1
          %p171 = scmp.lt.s32.totalorder %s168, 62
          %s172 = scalar_select %p171, %s168, 62
          %s173 = smul.addr %s170, 63
          %s174 = sadd.s32 %s172, %s173
          %s175 = smul.addr %s174, 4
          %s176 = scalar_lea.vmem %s0, %s175
          %s177 = sadd.s32 %s19, %s21
          %s178 = smul.u32 63, %s177
        $region20: #{tpu_custom_call.1} parent=15 // pred_fallthru
          _
        // Predicated region
        $region21: #{tpu_custom_call.1} parent=15 // pred_check
          %p179 = pneg %p85
        $region22: #{tpu_custom_call.1} parent=15 // pred_check_branch
          %181 = sbr.rel (%p179) target = $region24
        $region23: #{tpu_custom_call.1} parent=15 // pred_region
          %s182 = sadd.s32 %s19, %s21
          %s183 = smul.u32 63, %s182
          %p184 = scmp.lt.s32.totalorder %s20, 1
          %s185 = scalar_select %p184, %s20, 1
          %p186 = scmp.lt.s32.totalorder %s183, 62
          %s187 = scalar_select %p186, %s183, 62
          %s188 = smul.addr %s185, 63
          %s189 = sadd.s32 %s187, %s188
          %s190 = smul.addr %s189, 4
          %s191 = scalar_lea.vmem %s1, %s190
          %s192 = sadd.s32 %s19, %s21
          %s193 = smul.u32 63, %s192
        $region24: #{tpu_custom_call.1} parent=15 // pred_fallthru
          _
        // Predicated region
        $region25: #{tpu_custom_call.1} parent=15 // pred_check
          %p194 = pneg %p111
        $region26: #{tpu_custom_call.1} parent=15 // pred_check_branch
          %196 = sbr.rel (%p194) target = $region28
        $region27: #{tpu_custom_call.1} parent=15 // pred_region
          %p197 = scmp.lt.s32.totalorder %s20, 1
          %s198 = scalar_select %p197, %s20, 1
          %s199 = smul.addr %s198, 16
          %s200 = smul.addr %s199, 8
          %s201 = scalar_lea.vmem %s2, %s200
        $region28: #{tpu_custom_call.1} parent=15 // pred_fallthru
          _
      $region16: #{tpu_custom_call.1} parent=5 // pred_fallthru
        _
      %p202 = scmp.le.s32.totalorder 1, %s12
      %p203 = scmp.lt.s32.totalorder %s12, 3
      %p204 = pnand %p202, %p203
      %p205 = pneg %p204
      // Predicated region
      $region29: #{tpu_custom_call.1} parent=5 // pred_check
        _
      $region30: #{tpu_custom_call.1} parent=5 // pred_check_branch
        %207 = sbr.rel (%p204) target = $region32
      $region31: #{tpu_custom_call.1} parent=5 // pred_region
        %s208 = ssub.s32 %s12, 1
        %s209 = sadd.s32 %s22, %s24
        %s210 = smul.u32 63, %s209
        %p211 = scmp.lt.s32.totalorder %s23, 1
        %s212 = scalar_select %p211, %s23, 1
        %p213 = scmp.lt.s32.totalorder %s210, 62
        %s214 = scalar_select %p213, %s210, 62
        %s215 = smul.addr %s212, 63
        %s216 = sadd.s32 %s214, %s215
        %s217 = smul.addr %s216, 4
        %s218 = scalar_lea.vmem %s0, %s217
        %p219 = pneg %p61
        %p220 = pneg %p58
        %s221 = sadd.s32 %s22, %s24
        %s222 = smul.u32 63, %s221
        %p223 = scmp.lt.s32.totalorder %s23, 1
        %s224 = scalar_select %p223, %s23, 1
        %p225 = scmp.lt.s32.totalorder %s222, 62
        %s226 = scalar_select %p225, %s222, 62
        %s227 = smul.addr %s224, 63
        %s228 = sadd.s32 %s226, %s227
        %s229 = smul.addr %s228, 4
        %s230 = scalar_lea.vmem %s1, %s229
        %p231 = pneg %p91
        %p232 = pneg %p88
        %p233 = scmp.lt.s32.totalorder %s23, 1
        %s234 = scalar_select %p233, %s23, 1
        %s235 = smul.addr %s234, 16
        %s236 = smul.addr %s235, 8
        %s237 = scalar_lea.vmem %s2, %s236
        %p238 = pneg %p117
        %p239 = pneg %p114
        %p240 = pneg %p145
        %p241 = pneg %p142
        %s242 = sand.u32 %s132, 1
        %s243 = scalar_lea.sflag [#allocation4], %s242
        %s244 = sand.u32 %s132, 1
        %s245 = smul.addr %s244, 64
        %s246 = scalar_lea.vmem [#allocation3], %s245
        %s247 = sadd.s32 %s22, %s24
        %s248 = smul.u32 63, %s247
        %p249 = scmp.lt.s32.totalorder %s23, 1
        %s250 = scalar_select %p249, %s23, 1
        %p251 = scmp.lt.s32.totalorder %s248, 62
        %s252 = scalar_select %p251, %s248, 62
        %s253 = smul.addr %s250, 63
        %s254 = sadd.s32 %s252, %s253
        %s255 = smul.addr %s254, 4
        %s256 = scalar_lea.vmem %s0, %s255
        %s257 = sadd.s32 %s22, %s24
        %s258 = smul.u32 63, %s257
        %s259 = sadd.s32 %s22, %s24
        %s260 = smul.u32 63, %s259
        %p261 = scmp.lt.s32.totalorder %s23, 1
        %s262 = scalar_select %p261, %s23, 1
        %p263 = scmp.lt.s32.totalorder %s260, 62
        %s264 = scalar_select %p263, %s260, 62
        %s265 = smul.addr %s262, 63
        %s266 = sadd.s32 %s264, %s265
        %s267 = smul.addr %s266, 4
        %s268 = scalar_lea.vmem %s1, %s267
        %s269 = sadd.s32 %s22, %s24
        %s270 = smul.u32 63, %s269
        %p271 = scmp.lt.s32.totalorder %s23, 1
        %s272 = scalar_select %p271, %s23, 1
        %s273 = smul.addr %s272, 16
        %s274 = smul.addr %s273, 8
        %s275 = scalar_lea.vmem %s2, %s274
        %p277 = scmp.eq.s32.totalorder %s24, 0
        // Predicated region
        $region33: #{tpu_custom_call.1} parent=31 // pred_check
          %p278 = pneg %p277
        $region34: #{tpu_custom_call.1} parent=31 // pred_check_branch
          %280 = sbr.rel (%p278) target = $region36
        $region35: #{tpu_custom_call.1} parent=31 // pred_region
          %281 = vst [vmem:[#allocation2] sm:$0xff] 0.0
          %282 = vst [vmem:[#allocation2 + $0x8] sm:$0xff] 0.0
          %283 = vst [vmem:[#allocation2 + $0x10] sm:$0xff] 0.0
          %284 = vst [vmem:[#allocation2 + $0x18] sm:$0xff] 0.0
          %285 = vst [vmem:[#allocation2 + $0x20] sm:$0xff] 0.0
          %286 = vst [vmem:[#allocation2 + $0x28] sm:$0xff] 0.0
          %287 = vst [vmem:[#allocation2 + $0x30] sm:$0xff] 0.0
          %288 = vst [vmem:[#allocation2 + $0x38] sm:$0xff] 0.0
          %289 = vst [vmem:[#allocation2 + $0x40] sm:$0xff] 0.0
          %290 = vst [vmem:[#allocation2 + $0x48] sm:$0xff] 0.0
          %291 = vst [vmem:[#allocation2 + $0x50] sm:$0xff] 0.0
          %292 = vst [vmem:[#allocation2 + $0x58] sm:$0xff] 0.0
          %293 = vst [vmem:[#allocation2 + $0x60] sm:$0xff] 0.0
          %294 = vst [vmem:[#allocation2 + $0x68] sm:$0xff] 0.0
          %295 = vst [vmem:[#allocation2 + $0x70] sm:$0xff] 0.0
          %296 = vst [vmem:[#allocation2 + $0x78] sm:$0xff] 0.0
        $region36: #{tpu_custom_call.1} parent=31 // pred_fallthru
          _
        %v297 = vld [vmem:[%s256] sm:$0xf]
        %v298 = vld [vmem:[%s256 + $0x4] sm:$0xf]
        %v299 = vld [vmem:[%s256 + $0x8] sm:$0xf]
        %v300 = vld [vmem:[%s256 + $0xc] sm:$0xf]
        %v301 = vld [vmem:[%s256 + $0x10] sm:$0xf]
        %v302 = vld [vmem:[%s256 + $0x14] sm:$0xf]
        %v303 = vld [vmem:[%s256 + $0x18] sm:$0xf]
        %v304 = vld [vmem:[%s256 + $0x1c] sm:$0xf]
        %v305 = vld [vmem:[%s256 + $0x20] sm:$0xf]
        %v306 = vld [vmem:[%s256 + $0x24] sm:$0xf]
        %v307 = vld [vmem:[%s256 + $0x28] sm:$0xf]
        %v308 = vld [vmem:[%s256 + $0x2c] sm:$0xf]
        %v309 = vld [vmem:[%s256 + $0x30] sm:$0xf]
        %v310 = vld [vmem:[%s256 + $0x34] sm:$0xf]
        %v311 = vld [vmem:[%s256 + $0x38] sm:$0xf]
        %v312 = vld [vmem:[%s256 + $0x3c] sm:$0xf]
        %v313 = vld [vmem:[%s256 + $0x40] sm:$0xf]
        %v314 = vld [vmem:[%s256 + $0x44] sm:$0xf]
        %v315 = vld [vmem:[%s256 + $0x48] sm:$0xf]
        %v316 = vld [vmem:[%s256 + $0x4c] sm:$0xf]
        %v317 = vld [vmem:[%s256 + $0x50] sm:$0xf]
        %v318 = vld [vmem:[%s256 + $0x54] sm:$0xf]
        %v319 = vld [vmem:[%s256 + $0x58] sm:$0xf]
        %v320 = vld [vmem:[%s256 + $0x5c] sm:$0xf]
        %v321 = vld [vmem:[%s256 + $0x60] sm:$0xf]
        %v322 = vld [vmem:[%s256 + $0x64] sm:$0xf]
        %v323 = vld [vmem:[%s256 + $0x68] sm:$0xf]
        %v324 = vld [vmem:[%s256 + $0x6c] sm:$0xf]
        %v325 = vld [vmem:[%s256 + $0x70] sm:$0xf]
        %v326 = vld [vmem:[%s256 + $0x74] sm:$0xf]
        %v327 = vld [vmem:[%s256 + $0x78] sm:$0xf]
        %v328 = vld [vmem:[%s256 + $0x7c] sm:$0xf]
        %v329 = vld [vmem:[%s256 + $0x80] sm:$0xf]
        %v330 = vld [vmem:[%s256 + $0x84] sm:$0xf]
        %v331 = vld [vmem:[%s256 + $0x88] sm:$0xf]
        %v332 = vld [vmem:[%s256 + $0x8c] sm:$0xf]
        %v333 = vld [vmem:[%s256 + $0x90] sm:$0xf]
        %v334 = vld [vmem:[%s256 + $0x94] sm:$0xf]
        %v335 = vld [vmem:[%s256 + $0x98] sm:$0xf]
        %v336 = vld [vmem:[%s256 + $0x9c] sm:$0xf]
        %v337 = vld [vmem:[%s256 + $0xa0] sm:$0xf]
        %v338 = vld [vmem:[%s256 + $0xa4] sm:$0xf]
        %v339 = vld [vmem:[%s256 + $0xa8] sm:$0xf]
        %v340 = vld [vmem:[%s256 + $0xac] sm:$0xf]
        %v341 = vld [vmem:[%s256 + $0xb0] sm:$0xf]
        %v342 = vld [vmem:[%s256 + $0xb4] sm:$0xf]
        %v343 = vld [vmem:[%s256 + $0xb8] sm:$0xf]
        %v344 = vld [vmem:[%s256 + $0xbc] sm:$0xf]
        %v345 = vld [vmem:[%s256 + $0xc0] sm:$0xf]
        %v346 = vld [vmem:[%s256 + $0xc4] sm:$0xf]
        %v347 = vld [vmem:[%s256 + $0xc8] sm:$0xf]
        %v348 = vld [vmem:[%s256 + $0xcc] sm:$0xf]
        %v349 = vld [vmem:[%s256 + $0xd0] sm:$0xf]
        %v350 = vld [vmem:[%s256 + $0xd4] sm:$0xf]
        %v351 = vld [vmem:[%s256 + $0xd8] sm:$0xf]
        %v352 = vld [vmem:[%s256 + $0xdc] sm:$0xf]
        %v353 = vld [vmem:[%s256 + $0xe0] sm:$0xf]
        %v354 = vld [vmem:[%s256 + $0xe4] sm:$0xf]
        %v355 = vld [vmem:[%s256 + $0xe8] sm:$0xf]
        %v356 = vld [vmem:[%s256 + $0xec] sm:$0xf]
        %v357 = vld [vmem:[%s256 + $0xf0] sm:$0xf]
        %v358 = vld [vmem:[%s256 + $0xf4] sm:$0xf]
        %v359 = vld [vmem:[%s256 + $0xf8] sm:$0x3]
        %v360 = vld [vmem:[%s268] sm:$0xf]
        %v361 = vld [vmem:[%s268 + $0x4] sm:$0xf]
        %v362 = vld [vmem:[%s268 + $0x8] sm:$0xf]
        %v363 = vld [vmem:[%s268 + $0xc] sm:$0xf]
        %v364 = vld [vmem:[%s268 + $0x10] sm:$0xf]
        %v365 = vld [vmem:[%s268 + $0x14] sm:$0xf]
        %v366 = vld [vmem:[%s268 + $0x18] sm:$0xf]
        %v367 = vld [vmem:[%s268 + $0x1c] sm:$0xf]
        %v368 = vld [vmem:[%s268 + $0x20] sm:$0xf]
        %v369 = vld [vmem:[%s268 + $0x24] sm:$0xf]
        %v370 = vld [vmem:[%s268 + $0x28] sm:$0xf]
        %v371 = vld [vmem:[%s268 + $0x2c] sm:$0xf]
        %v372 = vld [vmem:[%s268 + $0x30] sm:$0xf]
        %v373 = vld [vmem:[%s268 + $0x34] sm:$0xf]
        %v374 = vld [vmem:[%s268 + $0x38] sm:$0xf]
        %v375 = vld [vmem:[%s268 + $0x3c] sm:$0xf]
        %v376 = vld [vmem:[%s268 + $0x40] sm:$0xf]
        %v377 = vld [vmem:[%s268 + $0x44] sm:$0xf]
        %v378 = vld [vmem:[%s268 + $0x48] sm:$0xf]
        %v379 = vld [vmem:[%s268 + $0x4c] sm:$0xf]
        %v380 = vld [vmem:[%s268 + $0x50] sm:$0xf]
        %v381 = vld [vmem:[%s268 + $0x54] sm:$0xf]
        %v382 = vld [vmem:[%s268 + $0x58] sm:$0xf]
        %v383 = vld [vmem:[%s268 + $0x5c] sm:$0xf]
        %v384 = vld [vmem:[%s268 + $0x60] sm:$0xf]
        %v385 = vld [vmem:[%s268 + $0x64] sm:$0xf]
        %v386 = vld [vmem:[%s268 + $0x68] sm:$0xf]
        %v387 = vld [vmem:[%s268 + $0x6c] sm:$0xf]
        %v388 = vld [vmem:[%s268 + $0x70] sm:$0xf]
        %v389 = vld [vmem:[%s268 + $0x74] sm:$0xf]
        %v390 = vld [vmem:[%s268 + $0x78] sm:$0xf]
        %v391 = vld [vmem:[%s268 + $0x7c] sm:$0xf]
        %v392 = vld [vmem:[%s268 + $0x80] sm:$0xf]
        %v393 = vld [vmem:[%s268 + $0x84] sm:$0xf]
        %v394 = vld [vmem:[%s268 + $0x88] sm:$0xf]
        %v395 = vld [vmem:[%s268 + $0x8c] sm:$0xf]
        %v396 = vld [vmem:[%s268 + $0x90] sm:$0xf]
        %v397 = vld [vmem:[%s268 + $0x94] sm:$0xf]
        %v398 = vld [vmem:[%s268 + $0x98] sm:$0xf]
        %v399 = vld [vmem:[%s268 + $0x9c] sm:$0xf]
        %v400 = vld [vmem:[%s268 + $0xa0] sm:$0xf]
        %v401 = vld [vmem:[%s268 + $0xa4] sm:$0xf]
        %v402 = vld [vmem:[%s268 + $0xa8] sm:$0xf]
        %v403 = vld [vmem:[%s268 + $0xac] sm:$0xf]
        %v404 = vld [vmem:[%s268 + $0xb0] sm:$0xf]
        %v405 = vld [vmem:[%s268 + $0xb4] sm:$0xf]
        %v406 = vld [vmem:[%s268 + $0xb8] sm:$0xf]
        %v407 = vld [vmem:[%s268 + $0xbc] sm:$0xf]
        %v408 = vld [vmem:[%s268 + $0xc0] sm:$0xf]
        %v409 = vld [vmem:[%s268 + $0xc4] sm:$0xf]
        %v410 = vld [vmem:[%s268 + $0xc8] sm:$0xf]
        %v411 = vld [vmem:[%s268 + $0xcc] sm:$0xf]
        %v412 = vld [vmem:[%s268 + $0xd0] sm:$0xf]
        %v413 = vld [vmem:[%s268 + $0xd4] sm:$0xf]
        %v414 = vld [vmem:[%s268 + $0xd8] sm:$0xf]
        %v415 = vld [vmem:[%s268 + $0xdc] sm:$0xf]
        %v416 = vld [vmem:[%s268 + $0xe0] sm:$0xf]
        %v417 = vld [vmem:[%s268 + $0xe4] sm:$0xf]
        %v418 = vld [vmem:[%s268 + $0xe8] sm:$0xf]
        %v419 = vld [vmem:[%s268 + $0xec] sm:$0xf]
        %v420 = vld [vmem:[%s268 + $0xf0] sm:$0xf]
        %v421 = vld [vmem:[%s268 + $0xf4] sm:$0xf]
        %v422 = vld [vmem:[%s268 + $0xf8] sm:$0x3]
        %v423 = vld [vmem:[#allocation2] sm:$0xff]
        %v424 = vld [vmem:[#allocation2 + $0x8] sm:$0xff]
        %v425 = vld [vmem:[#allocation2 + $0x10] sm:$0xff]
        %v426 = vld [vmem:[#allocation2 + $0x18] sm:$0xff]
        %v427 = vld [vmem:[#allocation2 + $0x20] sm:$0xff]
        %v428 = vld [vmem:[#allocation2 + $0x28] sm:$0xff]
        %v429 = vld [vmem:[#allocation2 + $0x30] sm:$0xff]
        %v430 = vld [vmem:[#allocation2 + $0x38] sm:$0xff]
        %v431 = vld [vmem:[#allocation2 + $0x40] sm:$0xff]
        %v432 = vld [vmem:[#allocation2 + $0x48] sm:$0xff]
        %v433 = vld [vmem:[#allocation2 + $0x50] sm:$0xff]
        %v434 = vld [vmem:[#allocation2 + $0x58] sm:$0xff]
        %v435 = vld [vmem:[#allocation2 + $0x60] sm:$0xff]
        %v436 = vld [vmem:[#allocation2 + $0x68] sm:$0xff]
        %v437 = vld [vmem:[#allocation2 + $0x70] sm:$0xff]
        %v438 = vld [vmem:[#allocation2 + $0x78] sm:$0xff]
        %v502 = vunpack.c.l.b16 %v297
        %v503 = vunpack.c.l.b16 %v298
        %v504 = vunpack.c.l.b16 %v299
        %v505 = vunpack.c.l.b16 %v300
        %v506 = vunpack.c.l.b16 %v301
        %v507 = vunpack.c.l.b16 %v302
        %v508 = vunpack.c.l.b16 %v303
        %v509 = vunpack.c.l.b16 %v304
        %v510 = vunpack.c.l.b16 %v305
        %v511 = vunpack.c.l.b16 %v306
        %v512 = vunpack.c.l.b16 %v307
        %v513 = vunpack.c.l.b16 %v308
        %v514 = vunpack.c.l.b16 %v309
        %v515 = vunpack.c.l.b16 %v310
        %v516 = vunpack.c.l.b16 %v311
        %v517 = vunpack.c.l.b16 %v312
        %v518 = vunpack.c.l.b16 %v313
        %v519 = vunpack.c.l.b16 %v314
        %v520 = vunpack.c.l.b16 %v315
        %v521 = vunpack.c.l.b16 %v316
        %v522 = vunpack.c.l.b16 %v317
        %v523 = vunpack.c.l.b16 %v318
        %v524 = vunpack.c.l.b16 %v319
        %v525 = vunpack.c.l.b16 %v320
        %v526 = vunpack.c.l.b16 %v321
        %v527 = vunpack.c.l.b16 %v322
        %v528 = vunpack.c.l.b16 %v323
        %v529 = vunpack.c.l.b16 %v324
        %v530 = vunpack.c.l.b16 %v325
        %v531 = vunpack.c.l.b16 %v326
        %v532 = vunpack.c.l.b16 %v327
        %v533 = vunpack.c.l.b16 %v328
        %v534 = vunpack.c.l.b16 %v329
        %v535 = vunpack.c.l.b16 %v330
        %v536 = vunpack.c.l.b16 %v331
        %v537 = vunpack.c.l.b16 %v332
        %v538 = vunpack.c.l.b16 %v333
        %v539 = vunpack.c.l.b16 %v334
        %v540 = vunpack.c.l.b16 %v335
        %v541 = vunpack.c.l.b16 %v336
        %v542 = vunpack.c.l.b16 %v337
        %v543 = vunpack.c.l.b16 %v338
        %v544 = vunpack.c.l.b16 %v339
        %v545 = vunpack.c.l.b16 %v340
        %v546 = vunpack.c.l.b16 %v341
        %v547 = vunpack.c.l.b16 %v342
        %v548 = vunpack.c.l.b16 %v343
        %v549 = vunpack.c.l.b16 %v344
        %v550 = vunpack.c.l.b16 %v345
        %v551 = vunpack.c.l.b16 %v346
        %v552 = vunpack.c.l.b16 %v347
        %v553 = vunpack.c.l.b16 %v348
        %v554 = vunpack.c.l.b16 %v349
        %v555 = vunpack.c.l.b16 %v350
        %v556 = vunpack.c.l.b16 %v351
        %v557 = vunpack.c.l.b16 %v352
        %v558 = vunpack.c.l.b16 %v353
        %v559 = vunpack.c.l.b16 %v354
        %v560 = vunpack.c.l.b16 %v355
        %v561 = vunpack.c.l.b16 %v356
        %v562 = vunpack.c.l.b16 %v357
        %v563 = vunpack.c.l.b16 %v358
        %v564 = vunpack.c.l.b16 %v359
        %v565 = vpack.c.b16 %v503, %v502
        %v566 = vpack.c.b16 %v505, %v504
        %v567 = vpack.c.b16 %v507, %v506
        %v568 = vpack.c.b16 %v509, %v508
        %v569 = vpack.c.b16 %v511, %v510
        %v570 = vpack.c.b16 %v513, %v512
        %v571 = vpack.c.b16 %v515, %v514
        %v572 = vpack.c.b16 %v517, %v516
        %v573 = vpack.c.b16 %v519, %v518
        %v574 = vpack.c.b16 %v521, %v520
        %v575 = vpack.c.b16 %v523, %v522
        %v576 = vpack.c.b16 %v525, %v524
        %v577 = vpack.c.b16 %v527, %v526
        %v578 = vpack.c.b16 %v529, %v528
        %v579 = vpack.c.b16 %v531, %v530
        %v580 = vpack.c.b16 %v533, %v532
        %v581 = vpack.c.b16 %v535, %v534
        %v582 = vpack.c.b16 %v537, %v536
        %v583 = vpack.c.b16 %v539, %v538
        %v584 = vpack.c.b16 %v541, %v540
        %v585 = vpack.c.b16 %v543, %v542
        %v586 = vpack.c.b16 %v545, %v544
        %v587 = vpack.c.b16 %v547, %v546
        %v588 = vpack.c.b16 %v549, %v548
        %v589 = vpack.c.b16 %v551, %v550
        %v590 = vpack.c.b16 %v553, %v552
        %v591 = vpack.c.b16 %v555, %v554
        %v592 = vpack.c.b16 %v557, %v556
        %v593 = vpack.c.b16 %v559, %v558
        %v594 = vpack.c.b16 %v561, %v560
        %v595 = vpack.c.b16 %v563, %v562
        %v596 = vpack.c.b16 %v564, %v564
        %629 = vxpose.xlu0.c.b16.start [1/8] %v565, 128
        %630 = vxpose.xlu0.c.b16.cont [2/8] %v566, 128
        %631 = vxpose.xlu0.c.b16.cont [3/8] %v567, 128
        %632 = vxpose.xlu0.c.b16.cont [4/8] %v568, 128
        %633 = vxpose.xlu0.c.b16.cont [5/8] %v569, 128
        %634 = vxpose.xlu0.c.b16.cont [6/8] %v570, 128
        %635 = vxpose.xlu0.c.b16.cont [7/8] %v571, 128
        %636 = vxpose.xlu0.c.b16.end [8/8] %v572, 128
        %v637 = vpop.trf.xlu0
        %v638 = vpop.trf.xlu0
        %v639 = vpop.trf.xlu0
        %v640 = vpop.trf.xlu0
        %v641 = vpop.trf.xlu0
        %v642 = vpop.trf.xlu0
        %v643 = vpop.trf.xlu0
        %v644 = vpop.trf.xlu0
        %645 = vxpose.xlu0.c.b16.start [1/8] %v573, 128
        %646 = vxpose.xlu0.c.b16.cont [2/8] %v574, 128
        %647 = vxpose.xlu0.c.b16.cont [3/8] %v575, 128
        %648 = vxpose.xlu0.c.b16.cont [4/8] %v576, 128
        %649 = vxpose.xlu0.c.b16.cont [5/8] %v577, 128
        %650 = vxpose.xlu0.c.b16.cont [6/8] %v578, 128
        %651 = vxpose.xlu0.c.b16.cont [7/8] %v579, 128
        %652 = vxpose.xlu0.c.b16.end [8/8] %v580, 128
        %v653 = vpop.trf.xlu0
        %v654 = vpop.trf.xlu0
        %v655 = vpop.trf.xlu0
        %v656 = vpop.trf.xlu0
        %v657 = vpop.trf.xlu0
        %v658 = vpop.trf.xlu0
        %v659 = vpop.trf.xlu0
        %v660 = vpop.trf.xlu0
        %661 = vxpose.xlu0.c.b16.start [1/8] %v581, 128
        %662 = vxpose.xlu0.c.b16.cont [2/8] %v582, 128
        %663 = vxpose.xlu0.c.b16.cont [3/8] %v583, 128
        %664 = vxpose.xlu0.c.b16.cont [4/8] %v584, 128
        %665 = vxpose.xlu0.c.b16.cont [5/8] %v585, 128
        %666 = vxpose.xlu0.c.b16.cont [6/8] %v586, 128
        %667 = vxpose.xlu0.c.b16.cont [7/8] %v587, 128
        %668 = vxpose.xlu0.c.b16.end [8/8] %v588, 128
        %v669 = vpop.trf.xlu0
        %v670 = vpop.trf.xlu0
        %v671 = vpop.trf.xlu0
        %v672 = vpop.trf.xlu0
        %v673 = vpop.trf.xlu0
        %v674 = vpop.trf.xlu0
        %v675 = vpop.trf.xlu0
        %v676 = vpop.trf.xlu0
        %677 = vxpose.xlu0.c.b16.start [1/8] %v589, 128
        %678 = vxpose.xlu0.c.b16.cont [2/8] %v590, 128
        %679 = vxpose.xlu0.c.b16.cont [3/8] %v591, 128
        %680 = vxpose.xlu0.c.b16.cont [4/8] %v592, 128
        %681 = vxpose.xlu0.c.b16.cont [5/8] %v593, 128
        %682 = vxpose.xlu0.c.b16.cont [6/8] %v594, 128
        %683 = vxpose.xlu0.c.b16.cont [7/8] %v595, 128
        %684 = vxpose.xlu0.c.b16.end [8/8] %v596, 128
        %v685 = vpop.trf.xlu0
        %v686 = vpop.trf.xlu0
        %v687 = vpop.trf.xlu0
        %v688 = vpop.trf.xlu0
        %v689 = vpop.trf.xlu0
        %v690 = vpop.trf.xlu0
        %v691 = vpop.trf.xlu0
        %v692 = vpop.trf.xlu0
        %v756 = vunpack.c.l.b16 %v360
        %v757 = vunpack.c.l.b16 %v361
        %v758 = vunpack.c.l.b16 %v362
        %v759 = vunpack.c.l.b16 %v363
        %v760 = vunpack.c.l.b16 %v364
        %v761 = vunpack.c.l.b16 %v365
        %v762 = vunpack.c.l.b16 %v366
        %v763 = vunpack.c.l.b16 %v367
        %v764 = vunpack.c.l.b16 %v368
        %v765 = vunpack.c.l.b16 %v369
        %v766 = vunpack.c.l.b16 %v370
        %v767 = vunpack.c.l.b16 %v371
        %v768 = vunpack.c.l.b16 %v372
        %v769 = vunpack.c.l.b16 %v373
        %v770 = vunpack.c.l.b16 %v374
        %v771 = vunpack.c.l.b16 %v375
        %v772 = vunpack.c.l.b16 %v376
        %v773 = vunpack.c.l.b16 %v377
        %v774 = vunpack.c.l.b16 %v378
        %v775 = vunpack.c.l.b16 %v379
        %v776 = vunpack.c.l.b16 %v380
        %v777 = vunpack.c.l.b16 %v381
        %v778 = vunpack.c.l.b16 %v382
        %v779 = vunpack.c.l.b16 %v383
        %v780 = vunpack.c.l.b16 %v384
        %v781 = vunpack.c.l.b16 %v385
        %v782 = vunpack.c.l.b16 %v386
        %v783 = vunpack.c.l.b16 %v387
        %v784 = vunpack.c.l.b16 %v388
        %v785 = vunpack.c.l.b16 %v389
        %v786 = vunpack.c.l.b16 %v390
        %v787 = vunpack.c.l.b16 %v391
        %v788 = vunpack.c.l.b16 %v392
        %v789 = vunpack.c.l.b16 %v393
        %v790 = vunpack.c.l.b16 %v394
        %v791 = vunpack.c.l.b16 %v395
        %v792 = vunpack.c.l.b16 %v396
        %v793 = vunpack.c.l.b16 %v397
        %v794 = vunpack.c.l.b16 %v398
        %v795 = vunpack.c.l.b16 %v399
        %v796 = vunpack.c.l.b16 %v400
        %v797 = vunpack.c.l.b16 %v401
        %v798 = vunpack.c.l.b16 %v402
        %v799 = vunpack.c.l.b16 %v403
        %v800 = vunpack.c.l.b16 %v404
        %v801 = vunpack.c.l.b16 %v405
        %v802 = vunpack.c.l.b16 %v406
        %v803 = vunpack.c.l.b16 %v407
        %v804 = vunpack.c.l.b16 %v408
        %v805 = vunpack.c.l.b16 %v409
        %v806 = vunpack.c.l.b16 %v410
        %v807 = vunpack.c.l.b16 %v411
        %v808 = vunpack.c.l.b16 %v412
        %v809 = vunpack.c.l.b16 %v413
        %v810 = vunpack.c.l.b16 %v414
        %v811 = vunpack.c.l.b16 %v415
        %v812 = vunpack.c.l.b16 %v416
        %v813 = vunpack.c.l.b16 %v417
        %v814 = vunpack.c.l.b16 %v418
        %v815 = vunpack.c.l.b16 %v419
        %v816 = vunpack.c.l.b16 %v420
        %v817 = vunpack.c.l.b16 %v421
        %v818 = vunpack.c.l.b16 %v422
        %v819 = vpack.c.b16 %v757, %v756
        %v820 = vpack.c.b16 %v759, %v758
        %v821 = vpack.c.b16 %v761, %v760
        %v822 = vpack.c.b16 %v763, %v762
        %v823 = vpack.c.b16 %v765, %v764
        %v824 = vpack.c.b16 %v767, %v766
        %v825 = vpack.c.b16 %v769, %v768
        %v826 = vpack.c.b16 %v771, %v770
        %v827 = vpack.c.b16 %v773, %v772
        %v828 = vpack.c.b16 %v775, %v774
        %v829 = vpack.c.b16 %v777, %v776
        %v830 = vpack.c.b16 %v779, %v778
        %v831 = vpack.c.b16 %v781, %v780
        %v832 = vpack.c.b16 %v783, %v782
        %v833 = vpack.c.b16 %v785, %v784
        %v834 = vpack.c.b16 %v787, %v786
        %v835 = vpack.c.b16 %v789, %v788
        %v836 = vpack.c.b16 %v791, %v790
        %v837 = vpack.c.b16 %v793, %v792
        %v838 = vpack.c.b16 %v795, %v794
        %v839 = vpack.c.b16 %v797, %v796
        %v840 = vpack.c.b16 %v799, %v798
        %v841 = vpack.c.b16 %v801, %v800
        %v842 = vpack.c.b16 %v803, %v802
        %v843 = vpack.c.b16 %v805, %v804
        %v844 = vpack.c.b16 %v807, %v806
        %v845 = vpack.c.b16 %v809, %v808
        %v846 = vpack.c.b16 %v811, %v810
        %v847 = vpack.c.b16 %v813, %v812
        %v848 = vpack.c.b16 %v815, %v814
        %v849 = vpack.c.b16 %v817, %v816
        %v850 = vpack.c.b16 %v818, %v818
        %vm882 = vcmask 949248
        %v884 = vsel %vm882, %v685, 0
        %v887 = vsel %vm882, %v686, 0
        %v890 = vsel %vm882, %v687, 0
        %v893 = vsel %vm882, %v688, 0
        %v896 = vsel %vm882, %v689, 0
        %v899 = vsel %vm882, %v690, 0
        %v902 = vsel %vm882, %v691, 0
        %v905 = vsel %vm882, %v692, 0
        %vm907 = vcmask 1041408
        %v909 = vsel %vm907, %v850, 0
        %911 = vmatprep.subr.bf16.mxu0 0
        %912 = vmatpush1.bf16.msra.mxu0 %v819
        %913 = vmatprep.subr.bf16.mxu0 0
        %914 = vmatpush1.bf16.msra.mxu0 %v820
        %915 = vmatprep.subr.bf16.mxu0 0
        %916 = vmatpush1.bf16.msra.mxu0 %v821
        %917 = vmatprep.subr.bf16.mxu0 0
        %918 = vmatpush1.bf16.msra.mxu0 %v822
        %919 = vmatprep.subr.bf16.mxu0 0
        %920 = vmatpush1.bf16.msra.mxu0 %v823
        %921 = vmatprep.subr.bf16.mxu0 0
        %922 = vmatpush1.bf16.msra.mxu0 %v824
        %923 = vmatprep.subr.bf16.mxu0 0
        %924 = vmatpush1.bf16.msra.mxu0 %v825
        %925 = vmatprep.subr.bf16.mxu0 0
        %926 = vmatpush1.bf16.msra.mxu0 %v826
        %927 = vmatprep.subr.bf16.mxu0 0
        %928 = vmatpush1.bf16.msra.mxu0 %v827
        %929 = vmatprep.subr.bf16.mxu0 0
        %930 = vmatpush1.bf16.msra.mxu0 %v828
        %931 = vmatprep.subr.bf16.mxu0 0
        %932 = vmatpush1.bf16.msra.mxu0 %v829
        %933 = vmatprep.subr.bf16.mxu0 0
        %934 = vmatpush1.bf16.msra.mxu0 %v830
        %935 = vmatprep.subr.bf16.mxu0 0
        %936 = vmatpush1.bf16.msra.mxu0 %v831
        %937 = vmatprep.subr.bf16.mxu0 0
        %938 = vmatpush1.bf16.msra.mxu0 %v832
        %939 = vmatprep.subr.bf16.mxu0 0
        %940 = vmatpush1.bf16.msra.mxu0 %v833
        %941 = vmatprep.subr.bf16.mxu0 0
        %942 = vmatpush1.bf16.msra.mxu0 %v834
        %943 = vmatprep.mubr.bf16.mxu0 %v653
        %944 = vmatmul.mubr.bf16.gmra.mrb[0].mxu0 %v637
        %v945 = vpop.f32.mrb[0].mxu0
        %v946 = vadd.f32 0.0, %v945
        %v947 = vpop.f32.mrb[0].mxu0
        %v948 = vpop.f32.mrb[0].mxu0
        %v949 = vadd.f32 0.0, %v948
        %v950 = vpop.f32.mrb[0].mxu0
        %951 = vmatprep.mubr.bf16.mxu0 %v654
        %952 = vmatmul.mubr.bf16.gmra.mrb[0].mxu0 %v638
        %v953 = vpop.f32.mrb[0].mxu0
        %v954 = vadd.f32 0.0, %v953
        %v955 = vpop.f32.mrb[0].mxu0
        %v956 = vpop.f32.mrb[0].mxu0
        %v957 = vadd.f32 0.0, %v956
        %v958 = vpop.f32.mrb[0].mxu0
        %959 = vmatprep.mubr.bf16.mxu0 %v655
        %960 = vmatmul.mubr.bf16.gmra.mrb[0].mxu0 %v639
        %v961 = vpop.f32.mrb[0].mxu0
        %v962 = vadd.f32 0.0, %v961
        %v963 = vpop.f32.mrb[0].mxu0
        %v964 = vpop.f32.mrb[0].mxu0
        %v965 = vadd.f32 0.0, %v964
        %v966 = vpop.f32.mrb[0].mxu0
        %967 = vmatprep.mubr.bf16.mxu0 %v656
        %968 = vmatmul.mubr.bf16.gmra.mrb[0].mxu0 %v640
        %v969 = vpop.f32.mrb[0].mxu0
        %v970 = vadd.f32 0.0, %v969
        %v971 = vpop.f32.mrb[0].mxu0
        %v972 = vpop.f32.mrb[0].mxu0
        %v973 = vadd.f32 0.0, %v972
        %v974 = vpop.f32.mrb[0].mxu0
        %975 = vmatprep.mubr.bf16.mxu0 %v657
        %976 = vmatmul.mubr.bf16.gmra.mrb[0].mxu0 %v641
        %v977 = vpop.f32.mrb[0].mxu0
        %v978 = vadd.f32 0.0, %v977
        %v979 = vpop.f32.mrb[0].mxu0
        %v980 = vpop.f32.mrb[0].mxu0
        %v981 = vadd.f32 0.0, %v980
        %v982 = vpop.f32.mrb[0].mxu0
        %983 = vmatprep.mubr.bf16.mxu0 %v658
        %984 = vmatmul.mubr.bf16.gmra.mrb[0].mxu0 %v642
        %v985 = vpop.f32.mrb[0].mxu0
        %v986 = vadd.f32 0.0, %v985
        %v987 = vpop.f32.mrb[0].mxu0
        %v988 = vpop.f32.mrb[0].mxu0
        %v989 = vadd.f32 0.0, %v988
        %v990 = vpop.f32.mrb[0].mxu0
        %991 = vmatprep.mubr.bf16.mxu0 %v659
        %992 = vmatmul.mubr.bf16.gmra.mrb[0].mxu0 %v643
        %v993 = vpop.f32.mrb[0].mxu0
        %v994 = vadd.f32 0.0, %v993
        %v995 = vpop.f32.mrb[0].mxu0
        %v996 = vpop.f32.mrb[0].mxu0
        %v997 = vadd.f32 0.0, %v996
        %v998 = vpop.f32.mrb[0].mxu0
        %999 = vmatprep.mubr.bf16.mxu0 %v660
        %1000 = vmatmul.mubr.bf16.gmra.mrb[0].mxu0 %v644
        %v1001 = vpop.f32.mrb[0].mxu0
        %v1002 = vadd.f32 0.0, %v1001
        %v1003 = vpop.f32.mrb[0].mxu0
        %v1004 = vpop.f32.mrb[0].mxu0
        %v1005 = vadd.f32 0.0, %v1004
        %v1006 = vpop.f32.mrb[0].mxu0
        %1007 = vdwg.mxu0
        %1008 = vmatprep.subr.bf16.mxu0 0
        %1009 = vmatpush1.bf16.msra.mxu0 %v835
        %1010 = vmatprep.subr.bf16.mxu0 0
        %1011 = vmatpush1.bf16.msra.mxu0 %v836
        %1012 = vmatprep.subr.bf16.mxu0 0
        %1013 = vmatpush1.bf16.msra.mxu0 %v837
        %1014 = vmatprep.subr.bf16.mxu0 0
        %1015 = vmatpush1.bf16.msra.mxu0 %v838
        %1016 = vmatprep.subr.bf16.mxu0 0
        %1017 = vmatpush1.bf16.msra.mxu0 %v839
        %1018 = vmatprep.subr.bf16.mxu0 0
        %1019 = vmatpush1.bf16.msra.mxu0 %v840
        %1020 = vmatprep.subr.bf16.mxu0 0
        %1021 = vmatpush1.bf16.msra.mxu0 %v841
        %1022 = vmatprep.subr.bf16.mxu0 0
        %1023 = vmatpush1.bf16.msra.mxu0 %v842
        %1024 = vmatprep.subr.bf16.mxu0 0
        %1025 = vmatpush1.bf16.msra.mxu0 %v843
        %1026 = vmatprep.subr.bf16.mxu0 0
        %1027 = vmatpush1.bf16.msra.mxu0 %v844
        %1028 = vmatprep.subr.bf16.mxu0 0
        %1029 = vmatpush1.bf16.msra.mxu0 %v845
        %1030 = vmatprep.subr.bf16.mxu0 0
        %1031 = vmatpush1.bf16.msra.mxu0 %v846
        %1032 = vmatprep.subr.bf16.mxu0 0
        %1033 = vmatpush1.bf16.msra.mxu0 %v847
        %1034 = vmatprep.subr.bf16.mxu0 0
        %1035 = vmatpush1.bf16.msra.mxu0 %v848
        %1036 = vmatprep.subr.bf16.mxu0 0
        %1037 = vmatpush1.bf16.msra.mxu0 %v849
        %1038 = vmatprep.subr.bf16.mxu0 0
        %1039 = vmatpush1.bf16.msra.mxu0 %v909
        %1040 = vmatprep.mubr.bf16.mxu0 %v884
        %1041 = vmatmul.mubr.bf16.gmra.mrb[0].mxu0 %v669
        %v1042 = vpop.f32.mrb[0].mxu0
        %v1043 = vadd.f32 %v946, %v1042
        %v1044 = vpop.f32.mrb[0].mxu0
        %v1045 = vpop.f32.mrb[0].mxu0
        %v1046 = vadd.f32 %v949, %v1045
        %v1047 = vpop.f32.mrb[0].mxu0
        %1048 = vmatprep.mubr.bf16.mxu0 %v887
        %1049 = vmatmul.mubr.bf16.gmra.mrb[0].mxu0 %v670
        %v1050 = vpop.f32.mrb[0].mxu0
        %v1051 = vadd.f32 %v954, %v1050
        %v1052 = vpop.f32.mrb[0].mxu0
        %v1053 = vpop.f32.mrb[0].mxu0
        %v1054 = vadd.f32 %v957, %v1053
        %v1055 = vpop.f32.mrb[0].mxu0
        %1056 = vmatprep.mubr.bf16.mxu0 %v890
        %1057 = vmatmul.mubr.bf16.gmra.mrb[0].mxu0 %v671
        %v1058 = vpop.f32.mrb[0].mxu0
        %v1059 = vadd.f32 %v962, %v1058
        %v1060 = vpop.f32.mrb[0].mxu0
        %v1061 = vpop.f32.mrb[0].mxu0
        %v1062 = vadd.f32 %v965, %v1061
        %v1063 = vpop.f32.mrb[0].mxu0
        %1064 = vmatprep.mubr.bf16.mxu0 %v893
        %1065 = vmatmul.mubr.bf16.gmra.mrb[0].mxu0 %v672
        %v1066 = vpop.f32.mrb[0].mxu0
        %v1067 = vadd.f32 %v970, %v1066
        %v1068 = vpop.f32.mrb[0].mxu0
        %v1069 = vpop.f32.mrb[0].mxu0
        %v1070 = vadd.f32 %v973, %v1069
        %v1071 = vpop.f32.mrb[0].mxu0
        %1072 = vmatprep.mubr.bf16.mxu0 %v896
        %1073 = vmatmul.mubr.bf16.gmra.mrb[0].mxu0 %v673
        %v1074 = vpop.f32.mrb[0].mxu0
        %v1075 = vadd.f32 %v978, %v1074
        %v1076 = vpop.f32.mrb[0].mxu0
        %v1077 = vpop.f32.mrb[0].mxu0
        %v1078 = vadd.f32 %v981, %v1077
        %v1079 = vpop.f32.mrb[0].mxu0
        %1080 = vmatprep.mubr.bf16.mxu0 %v899
        %1081 = vmatmul.mubr.bf16.gmra.mrb[0].mxu0 %v674
        %v1082 = vpop.f32.mrb[0].mxu0
        %v1083 = vadd.f32 %v986, %v1082
        %v1084 = vpop.f32.mrb[0].mxu0
        %v1085 = vpop.f32.mrb[0].mxu0
        %v1086 = vadd.f32 %v989, %v1085
        %v1087 = vpop.f32.mrb[0].mxu0
        %1088 = vmatprep.mubr.bf16.mxu0 %v902
        %1089 = vmatmul.mubr.bf16.gmra.mrb[0].mxu0 %v675
        %v1090 = vpop.f32.mrb[0].mxu0
        %v1091 = vadd.f32 %v994, %v1090
        %v1092 = vpop.f32.mrb[0].mxu0
        %v1093 = vpop.f32.mrb[0].mxu0
        %v1094 = vadd.f32 %v997, %v1093
        %v1095 = vpop.f32.mrb[0].mxu0
        %1096 = vmatprep.mubr.bf16.mxu0 %v905
        %1097 = vmatmul.mubr.bf16.gmra.mrb[0].mxu0 %v676
        %v1098 = vpop.f32.mrb[0].mxu0
        %v1099 = vadd.f32 %v1002, %v1098
        %v1100 = vpop.f32.mrb[0].mxu0
        %v1101 = vpop.f32.mrb[0].mxu0
        %v1102 = vadd.f32 %v1005, %v1101
        %v1103 = vpop.f32.mrb[0].mxu0
        %1104 = vdwg.mxu0
        %v1105 = vadd.f32 %v423, %v1043
        %v1106 = vadd.f32 %v424, %v1046
        %v1107 = vadd.f32 %v425, %v1051
        %v1108 = vadd.f32 %v426, %v1054
        %v1109 = vadd.f32 %v427, %v1059
        %v1110 = vadd.f32 %v428, %v1062
        %v1111 = vadd.f32 %v429, %v1067
        %v1112 = vadd.f32 %v430, %v1070
        %v1113 = vadd.f32 %v431, %v1075
        %v1114 = vadd.f32 %v432, %v1078
        %v1115 = vadd.f32 %v433, %v1083
        %v1116 = vadd.f32 %v434, %v1086
        %v1117 = vadd.f32 %v435, %v1091
        %v1118 = vadd.f32 %v436, %v1094
        %v1119 = vadd.f32 %v437, %v1099
        %v1120 = vadd.f32 %v438, %v1102
        %1121 = vst [vmem:[#allocation2] sm:$0xff] %v1105
        %1122 = vst [vmem:[#allocation2 + $0x8] sm:$0xff] %v1106
        %1123 = vst [vmem:[#allocation2 + $0x10] sm:$0xff] %v1107
        %1124 = vst [vmem:[#allocation2 + $0x18] sm:$0xff] %v1108
        %1125 = vst [vmem:[#allocation2 + $0x20] sm:$0xff] %v1109
        %1126 = vst [vmem:[#allocation2 + $0x28] sm:$0xff] %v1110
        %1127 = vst [vmem:[#allocation2 + $0x30] sm:$0xff] %v1111
        %1128 = vst [vmem:[#allocation2 + $0x38] sm:$0xff] %v1112
        %1129 = vst [vmem:[#allocation2 + $0x40] sm:$0xff] %v1113
        %1130 = vst [vmem:[#allocation2 + $0x48] sm:$0xff] %v1114
        %1131 = vst [vmem:[#allocation2 + $0x50] sm:$0xff] %v1115
        %1132 = vst [vmem:[#allocation2 + $0x58] sm:$0xff] %v1116
        %1133 = vst [vmem:[#allocation2 + $0x60] sm:$0xff] %v1117
        %1134 = vst [vmem:[#allocation2 + $0x68] sm:$0xff] %v1118
        %1135 = vst [vmem:[#allocation2 + $0x70] sm:$0xff] %v1119
        %1136 = vst [vmem:[#allocation2 + $0x78] sm:$0xff] %v1120
        // Predicated region
        $region37: #{tpu_custom_call.1} parent=31 // pred_check
          %p1137 = pneg %p277
        $region38: #{tpu_custom_call.1} parent=31 // pred_check_branch
          %1139 = sbr.rel (%p1137) target = $region40
        $region39: #{tpu_custom_call.1} parent=31 // pred_region
          %v1140 = vld [vmem:[#allocation2] sm:$0xff]
          %v1141 = vld [vmem:[#allocation2 + $0x8] sm:$0xff]
          %v1142 = vld [vmem:[#allocation2 + $0x10] sm:$0xff]
          %v1143 = vld [vmem:[#allocation2 + $0x18] sm:$0xff]
          %v1144 = vld [vmem:[#allocation2 + $0x20] sm:$0xff]
          %v1145 = vld [vmem:[#allocation2 + $0x28] sm:$0xff]
          %v1146 = vld [vmem:[#allocation2 + $0x30] sm:$0xff]
          %v1147 = vld [vmem:[#allocation2 + $0x38] sm:$0xff]
          %v1148 = vld [vmem:[#allocation2 + $0x40] sm:$0xff]
          %v1149 = vld [vmem:[#allocation2 + $0x48] sm:$0xff]
          %v1150 = vld [vmem:[#allocation2 + $0x50] sm:$0xff]
          %v1151 = vld [vmem:[#allocation2 + $0x58] sm:$0xff]
          %v1152 = vld [vmem:[#allocation2 + $0x60] sm:$0xff]
          %v1153 = vld [vmem:[#allocation2 + $0x68] sm:$0xff]
          %v1154 = vld [vmem:[#allocation2 + $0x70] sm:$0xff]
          %v1155 = vld [vmem:[#allocation2 + $0x78] sm:$0xff]
          %v1156 = vld [vmem:[%s275] sm:$0xff]
          %v1157 = vld [vmem:[%s275 + $0x8] sm:$0xff]
          %v1158 = vld [vmem:[%s275 + $0x10] sm:$0xff]
          %v1159 = vld [vmem:[%s275 + $0x18] sm:$0xff]
          %v1160 = vld [vmem:[%s275 + $0x20] sm:$0xff]
          %v1161 = vld [vmem:[%s275 + $0x28] sm:$0xff]
          %v1162 = vld [vmem:[%s275 + $0x30] sm:$0xff]
          %v1163 = vld [vmem:[%s275 + $0x38] sm:$0xff]
          %v1164 = vld [vmem:[%s275 + $0x40] sm:$0xff]
          %v1165 = vld [vmem:[%s275 + $0x48] sm:$0xff]
          %v1166 = vld [vmem:[%s275 + $0x50] sm:$0xff]
          %v1167 = vld [vmem:[%s275 + $0x58] sm:$0xff]
          %v1168 = vld [vmem:[%s275 + $0x60] sm:$0xff]
          %v1169 = vld [vmem:[%s275 + $0x68] sm:$0xff]
          %v1170 = vld [vmem:[%s275 + $0x70] sm:$0xff]
          %v1171 = vld [vmem:[%s275 + $0x78] sm:$0xff]
          %v1172 = vmul.f32 %v1140, %v1156
          %v1173 = vmul.f32 %v1141, %v1157
          %v1174 = vmul.f32 %v1142, %v1158
          %v1175 = vmul.f32 %v1143, %v1159
          %v1176 = vmul.f32 %v1144, %v1160
          %v1177 = vmul.f32 %v1145, %v1161
          %v1178 = vmul.f32 %v1146, %v1162
          %v1179 = vmul.f32 %v1147, %v1163
          %v1180 = vmul.f32 %v1148, %v1164
          %v1181 = vmul.f32 %v1149, %v1165
          %v1182 = vmul.f32 %v1150, %v1166
          %v1183 = vmul.f32 %v1151, %v1167
          %v1184 = vmul.f32 %v1152, %v1168
          %v1185 = vmul.f32 %v1153, %v1169
          %v1186 = vmul.f32 %v1154, %v1170
          %v1187 = vmul.f32 %v1155, %v1171
          %v1188 = vpack.c.bf16 %v1173, %v1172
          %v1189 = vpack.c.bf16 %v1175, %v1174
          %v1190 = vpack.c.bf16 %v1177, %v1176
          %v1191 = vpack.c.bf16 %v1179, %v1178
          %v1192 = vpack.c.bf16 %v1181, %v1180
          %v1193 = vpack.c.bf16 %v1183, %v1182
          %v1194 = vpack.c.bf16 %v1185, %v1184
          %v1195 = vpack.c.bf16 %v1187, %v1186
          %v1204 = vunpack.c.l.b16 %v1188
          %v1205 = vunpack.c.h.b16 %v1188
          %v1206 = vunpack.c.l.b16 %v1189
          %v1207 = vunpack.c.h.b16 %v1189
          %v1208 = vunpack.c.l.b16 %v1190
          %v1209 = vunpack.c.h.b16 %v1190
          %v1210 = vunpack.c.l.b16 %v1191
          %v1211 = vunpack.c.h.b16 %v1191
          %v1212 = vunpack.c.l.b16 %v1192
          %v1213 = vunpack.c.h.b16 %v1192
          %v1214 = vunpack.c.l.b16 %v1193
          %v1215 = vunpack.c.h.b16 %v1193
          %v1216 = vunpack.c.l.b16 %v1194
          %v1217 = vunpack.c.h.b16 %v1194
          %v1218 = vunpack.c.l.b16 %v1195
          %v1219 = vunpack.c.h.b16 %v1195
          %v1220 = vpack.c.b16 %v1204, %v1204
          %v1221 = vpack.c.b16 %v1205, %v1205
          %v1222 = vpack.c.b16 %v1206, %v1206
          %v1223 = vpack.c.b16 %v1207, %v1207
          %v1224 = vpack.c.b16 %v1208, %v1208
          %v1225 = vpack.c.b16 %v1209, %v1209
          %v1226 = vpack.c.b16 %v1210, %v1210
          %v1227 = vpack.c.b16 %v1211, %v1211
          %v1228 = vpack.c.b16 %v1212, %v1212
          %v1229 = vpack.c.b16 %v1213, %v1213
          %v1230 = vpack.c.b16 %v1214, %v1214
          %v1231 = vpack.c.b16 %v1215, %v1215
          %v1232 = vpack.c.b16 %v1216, %v1216
          %v1233 = vpack.c.b16 %v1217, %v1217
          %v1234 = vpack.c.b16 %v1218, %v1218
          %v1235 = vpack.c.b16 %v1219, %v1219
          %1252 = vst [vmem:[%s246] sm:$0xf] %v1220
          %1253 = vst [vmem:[%s246 + $0x4] sm:$0xf] %v1221
          %1254 = vst [vmem:[%s246 + $0x8] sm:$0xf] %v1222
          %1255 = vst [vmem:[%s246 + $0xc] sm:$0xf] %v1223
          %1256 = vst [vmem:[%s246 + $0x10] sm:$0xf] %v1224
          %1257 = vst [vmem:[%s246 + $0x14] sm:$0xf] %v1225
          %1258 = vst [vmem:[%s246 + $0x18] sm:$0xf] %v1226
          %1259 = vst [vmem:[%s246 + $0x1c] sm:$0xf] %v1227
          %1260 = vst [vmem:[%s246 + $0x20] sm:$0xf] %v1228
          %1261 = vst [vmem:[%s246 + $0x24] sm:$0xf] %v1229
          %1262 = vst [vmem:[%s246 + $0x28] sm:$0xf] %v1230
          %1263 = vst [vmem:[%s246 + $0x2c] sm:$0xf] %v1231
          %1264 = vst [vmem:[%s246 + $0x30] sm:$0xf] %v1232
          %1265 = vst [vmem:[%s246 + $0x34] sm:$0xf] %v1233
          %1266 = vst [vmem:[%s246 + $0x38] sm:$0xf] %v1234
          %1267 = vst [vmem:[%s246 + $0x3c] sm:$0xf] %v1235
        $region40: #{tpu_custom_call.1} parent=31 // pred_fallthru
          _
        %s1268 = sand.u32 %s132, 1
        %s1269 = scalar_lea.sflag [#allocation4], %s1268
        %s1270 = sand.u32 %s132, 1
        %s1271 = smul.addr %s1270, 64
        %s1272 = scalar_lea.vmem [#allocation3], %s1271
        // Predicated region
        $region41: #{tpu_custom_call.1} parent=31 // pred_check
          %p1273 = pneg %p142
        $region42: #{tpu_custom_call.1} parent=31 // pred_check_branch
          %1275 = sbr.rel (%p1273) target = $region44
        $region43: #{tpu_custom_call.1} parent=31 // pred_region
          %s1277 = ssub.s32 1024, 1024
          %1278 = vsyncadd %s1269, %s1277
          %s1279 = smul.addr %s23, 16
          %s1280 = smul.addr %s22, 32
          %s1281 = sadd.s32 %s1279, %s1280
          %s1282 = smul.addr %s1281, 64
          %s1283 = scalar_lea.hbm %s3, %s1282
          %s1284 = sshll.u32 %s1272, 4
          %s1285 = int_to_ptr.vmem [resolvable:$true] %s1284
          %1290 = dma.vmem_to_hbm [thread:$0]  %s1285, 1024, %s1283, %s1269, 64, 64, 4
        $region44: #{tpu_custom_call.1} parent=31 // pred_fallthru
          _
      $region32: #{tpu_custom_call.1} parent=5 // pred_fallthru
        _
      %p1291 = scmp.le.s32.totalorder 2, %s12
      // Predicated region
      $region45: #{tpu_custom_call.1} parent=5 // pred_check
        %p1292 = pneg %p1291
      $region46: #{tpu_custom_call.1} parent=5 // pred_check_branch
        %1294 = sbr.rel (%p1292) target = $region48
      $region47: #{tpu_custom_call.1} parent=5 // pred_region
        %s1295 = ssub.s32 %s12, 2
        // Predicated region
        $region49: #{tpu_custom_call.1} parent=47 // pred_check
          %p1296 = pneg %p148
        $region50: #{tpu_custom_call.1} parent=47 // pred_check_branch
          %1298 = sbr.rel (%p1296) target = $region52
        $region51: #{tpu_custom_call.1} parent=47 // pred_region
          %s1299 = sand.u32 %s133, 1
          %s1300 = scalar_lea.sflag [#allocation4], %s1299
          %s1301 = sand.u32 %s133, 1
          %s1302 = smul.addr %s1301, 64
          %s1303 = scalar_lea.vmem [#allocation3], %s1302
          %1304 = dma.done %s1300, 1024
        $region52: #{tpu_custom_call.1} parent=47 // pred_fallthru
          _
      $region48: #{tpu_custom_call.1} parent=5 // pred_fallthru
        _
    $region6: #{tpu_custom_call.1} parent=1 // loop_footer
      %s16 = sadd.s32 1, %s12
    $region7: #{tpu_custom_call.1} parent=1 // loop_footer_branch
      %11 = sbr.rel target = $region3
    $region8: #{tpu_custom_call.1} parent=1 // loop_exit
      _
    %1305 = vsyncpa [#allocation4], 1
    %s1306 = scalar_lea.sflag [#allocation4], 1
    %1307 = vsyncpa %s1306, 1

</llo_original>
